<compile_context>
chip_gen: v6e
topology: v6e:2x2x1
jax: 0.10.0
libtpu: 0.0.40
codegen_flags: <defaults>
</compile_context>

<pallas_src>
import functools

import jax
import jax.numpy as jnp
from jax.experimental import pallas as pl
from jax.experimental.pallas import tpu as pltpu

_LANE = 128  # feature dim is padded to a multiple of the 128-lane vreg width


def _round_up(x, m):
    return (x + m - 1) // m * m


def _default_block_b():
    """256-row tiles on v6e/v7x (2x256x256 MXU), 128 on v5e/older/unknown."""
    try:
        kind = jax.devices()[0].device_kind.lower()
    except Exception:
        kind = ""
    if any(tag in kind for tag in ("v6", "v7", "trillium")):
        return 256
    return 128


def _auto_block_b(batch):
    base = _default_block_b()
    b8 = _round_up(batch, 8)          # sublane granularity
    bb = min(base, b8)
    # If the whole (padded) batch fits in a single tile but there is enough
    # work to split, use two tiles so dimension_semantics=("parallel",) can
    # shard the grid across v7x's two TensorCores.
    if bb == b8 and b8 > 128:
        bb = _round_up(pl.cdiv(b8, 2), 8)
    return int(bb)


def _vmem_limit_bytes(needed):
    """Generation-aware VMEM budget: physical capacity minus compiler headroom."""
    try:
        phys = int(pltpu.get_tpu_info().vmem_capacity_bytes)
    except Exception:
        phys = 64 * 1024 * 1024       # conservative fallback (v7x-sized)
    cap = max(phys - 12 * 1024 * 1024, 16 * 1024 * 1024)
    return int(min(max(int(1.5 * needed), 32 * 1024 * 1024), cap))


def prepare_params(w0, b0, w1, b1):
    """One-time parameter prep (call at parameter-creation time, not per forward).

    Takes PyTorch-layout (out, in) f32/bf16 weights and (h,) biases; returns
    (in, out) bf16 weights and (1, Hp) f32 biases, zero-padded to Hp (a
    multiple of 128 lanes).  Zero padding is exact: padded hidden/output
    columns come out as relu(0) = 0 and padded K rows contribute nothing.
    """
    h = w0.shape[0]
    hp = _round_up(h, _LANE)
    pad = hp - h

    def prep_w(w):
        wt = jnp.asarray(w).T.astype(jnp.bfloat16)          # (in, out), bf16
        if pad:
            wt = jnp.pad(wt, ((0, pad), (0, pad)))
        return wt

    def prep_b(b):
        b = jnp.asarray(b, jnp.float32)
        if pad:
            b = jnp.pad(b, (0, pad))
        return b.reshape(1, hp)

    return prep_w(w0), prep_b(b0), prep_w(w1), prep_b(b1)


def relu_block_kernel(x_ref, w0_ref, b0_ref, w1_ref, b1_ref, o_ref):
    """Fused two-layer MLP tile: relu(relu(x @ W0.T + b0) @ W1.T + b1).

    x_ref:  (block_b, Hp) native dtype (cast to bf16 here, on the VPU)
    w*_ref: (Hp, Hp)      bf16, already transposed to (in, out)
    b*_ref: (1, Hp)       f32
    o_ref:  (block_b, Hp) out dtype
    """
    x = x_ref[...].astype(jnp.bfloat16)

    h = jnp.dot(x, w0_ref[...], preferred_element_type=jnp.float32)
    h = jnp.maximum(h + b0_ref[...], 0.0)            # inter-layer ReLU (f32 VPU)

    h = jnp.dot(h.astype(jnp.bfloat16), w1_ref[...],
                preferred_element_type=jnp.float32)
    h = jnp.maximum(h + b1_ref[...], 0.0)            # postRelu

    o_ref[...] = h.astype(o_ref.dtype)


@functools.partial(jax.jit, static_argnames=("block_b", "out_dtype"))
def _relu_block_forward(x, w0_t, b0, w1_t, b1, *, block_b, out_dtype):
    B, H = x.shape
    Hp = w0_t.shape[0]
    assert w0_t.shape == (Hp, Hp) and w1_t.shape == (Hp, Hp), \
        "weights must be pre-padded/transposed via prepare_params()"
    assert Hp == _round_up(H, _LANE), "x feature dim inconsistent with params"

    Bp = _round_up(B, block_b)

    # Only x may need padding per forward (feature pad is required for a
    # correct K contraction; batch pad keeps block shapes exactly divisible).
    # TODO(synk): drop the batch pad in favor of Pallas ragged-last-block
    # handling once validated; the feature pad must stay explicit zeros.
    if (Bp, Hp) != (B, H):
        x = jnp.pad(x, ((0, Bp - B), (0, Hp - H)))

    x_item = jnp.dtype(x.dtype).itemsize
    out_item = jnp.dtype(out_dtype).itemsize

    # VMEM budget: single-buffered bf16 weights/biases (Buffered(1)),
    # double-buffered x / out tiles, f32 temporaries.
    needed = (2 * Hp * Hp * 2                      # W0 + W1, bf16, 1 buffer
              + 2 * Hp * 4                         # biases, f32, 1 buffer
              + 2 * block_b * Hp * x_item          # x tile, 2 buffers
              + 2 * block_b * Hp * out_item        # out tile, 2 buffers
              + 3 * block_b * Hp * 4)              # f32 accumulators / casts
    vmem_limit = _vmem_limit_bytes(needed)
    # TODO(synk): for Hp large enough that the resident weights blow the VMEM
    # cap (Hp >~ 3k on v7x), tile W1's output-feature dim with an inner
    # pltpu.emit_pipeline instead of shrinking block_b.

    cost = pl.CostEstimate(
        flops=2 * 2 * Bp * Hp * Hp,                # two matmuls
        transcendentals=0,
        bytes_accessed=(Bp * Hp * x_item           # x
                        + 2 * Hp * Hp * 2          # weights (bf16)
                        + 2 * Hp * 4               # biases (f32)
                        + Bp * Hp * out_item),     # output
    )

    grid = (Bp // block_b,)
    resident = pl.Buffered(1)  # block-invariant operands: no double buffering

    out = pl.pallas_call(
        relu_block_kernel,
        out_shape=jax.ShapeDtypeStruct((Bp, Hp), out_dtype),
        grid_spec=pltpu.PrefetchScalarGridSpec(
            num_scalar_prefetch=0,
            grid=grid,
            in_specs=[
                pl.BlockSpec((block_b, Hp), lambda i: (i, 0)),     # x tile
                pl.BlockSpec((Hp, Hp), lambda i: (0, 0),
                             pipeline_mode=resident),              # W0 (in,out)
                pl.BlockSpec((1, Hp), lambda i: (0, 0),
                             pipeline_mode=resident),              # b0
                pl.BlockSpec((Hp, Hp), lambda i: (0, 0),
                             pipeline_mode=resident),              # W1 (in,out)
                pl.BlockSpec((1, Hp), lambda i: (0, 0),
                             pipeline_mode=resident),              # b1
            ],
            out_specs=pl.BlockSpec((block_b, Hp), lambda i: (i, 0)),
        ),
        compiler_params=pltpu.CompilerParams(
            dimension_semantics=("parallel",),     # megacore sharding on v7x
            vmem_limit_bytes=vmem_limit,
        ),
        cost_estimate=cost,
    )(x, w0_t, b0, w1_t, b1)

    # Strip padding (no-op slices when already aligned).
    return out[:B, :H]


def relu_block_forward(x, params, *, block_b=None, out_dtype=None):
    """x: (B, H); params = prepare_params(w0, b0, w1, b1) (PyTorch layout in).

    block_b is auto-selected per TPU generation (256 on v6e/v7x, 128 on v5e),
    clamped so small batches are not over-padded.  out_dtype defaults to
    x.dtype; pass jnp.bfloat16 to halve writeback bytes on mem-bound shapes.
    """
    w0_t, b0, w1_t, b1 = params
    if block_b is None:
        block_b = _auto_block_b(x.shape[0])
    out_dtype = jnp.dtype(x.dtype if out_dtype is None else out_dtype)
    return _relu_block_forward(x, w0_t, b0, w1_t, b1,
                               block_b=int(block_b), out_dtype=out_dtype)


def init_linear_params(key, h):
    """Deterministic init mimicking nn.Linear default (uniform +/- 1/sqrt(h))."""
    kw, kb = jax.random.split(key)
    bound = 1.0 / jnp.sqrt(h)
    w = jax.random.uniform(kw, (h, h), jnp.float32, -bound, bound)  # (out, in)
    b = jax.random.uniform(kb, (h,), jnp.float32, -bound, bound)
    return w, b


def relu_block_reference(x, w0, b0, w1, b1):
    """Pure-JAX f32 reference matching PyTorch ReluBlock(h, layers=2, postRelu=True)."""
    h = x @ w0.T + b0
    h = jnp.maximum(h, 0.0)
    h = h @ w1.T + b1
    return jnp.maximum(h, 0.0)


if __name__ == "__main__":
    key = jax.random.PRNGKey(0)
    k_x, k_l0, k_l1 = jax.random.split(key, 3)

    B, H = 8, 32  # small demo shapes: batch=8, hidden=32
    x = jax.random.normal(k_x, (B, H), jnp.float32)

    w0, b0 = init_linear_params(k_l0, H)
    w1, b1 = init_linear_params(k_l1, H)

    # One-time parameter prep (transpose + pad + bf16 cast), not per forward.
    params = prepare_params(w0, b0, w1, b1)

    out = relu_block_forward(x, params)
    out = jax.block_until_ready(out)

    ref = relu_block_reference(x, w0, b0, w1, b1)
    assert out.shape == (B, H)
    # bf16 matmul operands with f32 accumulation: allow ~1% numerical slack.
    assert jnp.allclose(out, ref, atol=5e-2, rtol=5e-2), "mismatch vs reference"

    print("KERNEL_OK")
</pallas_src>

<mosaic_0001>
module attributes {stable_mosaic.version = 11 : i64} {
  func.func @relu_block_kernel(%arg0: i32, %arg1: memref<8x128xf32, #tpu.memory_space<vmem>>, %arg2: memref<128x128xbf16, #tpu.memory_space<vmem>>, %arg3: memref<1x128xf32, #tpu.memory_space<vmem>>, %arg4: memref<128x128xbf16, #tpu.memory_space<vmem>>, %arg5: memref<1x128xf32, #tpu.memory_space<vmem>>, %arg6: memref<8x128xf32, #tpu.memory_space<vmem>>) attributes {dimension_semantics = [#tpu.dimension_semantics<parallel>], iteration_bounds = array<i64: 1>, scalar_prefetch = 0 : i64, scratch_operands = 0 : i64, tpu.core_type = #tpu.core_type<tc>, window_params = [{transform_indices = @transform_0, window_bounds = array<i64: 8, 128>}, {pipeline_mode = #tpu.pipeline_mode<synchronous>, transform_indices = @transform_1, window_bounds = array<i64: 128, 128>}, {pipeline_mode = #tpu.pipeline_mode<synchronous>, transform_indices = @transform_2, window_bounds = array<i64: 1, 128>}, {pipeline_mode = #tpu.pipeline_mode<synchronous>, transform_indices = @transform_3, window_bounds = array<i64: 128, 128>}, {pipeline_mode = #tpu.pipeline_mode<synchronous>, transform_indices = @transform_4, window_bounds = array<i64: 1, 128>}, {transform_indices = @transform_5, window_bounds = array<i64: 8, 128>}]} {
    %c0 = arith.constant 0 : index
    %c0_0 = arith.constant 0 : index
    %0 = vector.load %arg1[%c0, %c0_0] : memref<8x128xf32, #tpu.memory_space<vmem>>, vector<8x128xf32>
    %1 = arith.truncf %0 : vector<8x128xf32> to vector<8x128xbf16>
    %c0_1 = arith.constant 0 : index
    %c0_2 = arith.constant 0 : index
    %2 = vector.load %arg2[%c0_1, %c0_2] : memref<128x128xbf16, #tpu.memory_space<vmem>>, vector<128x128xbf16>
    %cst = arith.constant dense<0.000000e+00> : vector<8x128xf32>
    %3 = tpu.matmul %1, %2, %cst {dimension_numbers = #tpu.dot_dimension_numbers<[1], [0], [0], [1], [0, 0, 1, 1], [], []>} : vector<8x128xbf16>, vector<128x128xbf16>, vector<8x128xf32> -> vector<8x128xf32>
    %c0_3 = arith.constant 0 : index
    %c0_4 = arith.constant 0 : index
    %4 = vector.load %arg3[%c0_3, %c0_4] : memref<1x128xf32, #tpu.memory_space<vmem>>, vector<1x128xf32>
    %5 = vector.broadcast %4 : vector<1x128xf32> to vector<8x128xf32>
    %6 = arith.addf %3, %5 : vector<8x128xf32>
    %cst_5 = arith.constant 0.000000e+00 : f32
    %7 = vector.broadcast %cst_5 : f32 to vector<8x128xf32>
    %8 = arith.maximumf %6, %7 : vector<8x128xf32>
    %9 = arith.truncf %8 : vector<8x128xf32> to vector<8x128xbf16>
    %c0_6 = arith.constant 0 : index
    %c0_7 = arith.constant 0 : index
    %10 = vector.load %arg4[%c0_6, %c0_7] : memref<128x128xbf16, #tpu.memory_space<vmem>>, vector<128x128xbf16>
    %cst_8 = arith.constant dense<0.000000e+00> : vector<8x128xf32>
    %11 = tpu.matmul %9, %10, %cst_8 {dimension_numbers = #tpu.dot_dimension_numbers<[1], [0], [0], [1], [0, 0, 1, 1], [], []>} : vector<8x128xbf16>, vector<128x128xbf16>, vector<8x128xf32> -> vector<8x128xf32>
    %c0_9 = arith.constant 0 : index
    %c0_10 = arith.constant 0 : index
    %12 = vector.load %arg5[%c0_9, %c0_10] : memref<1x128xf32, #tpu.memory_space<vmem>>, vector<1x128xf32>
    %13 = vector.broadcast %12 : vector<1x128xf32> to vector<8x128xf32>
    %14 = arith.addf %11, %13 : vector<8x128xf32>
    %cst_11 = arith.constant 0.000000e+00 : f32
    %15 = vector.broadcast %cst_11 : f32 to vector<8x128xf32>
    %16 = arith.maximumf %14, %15 : vector<8x128xf32>
    %c0_12 = arith.constant 0 : index
    %c0_13 = arith.constant 0 : index
    %17 = vector.load %arg6[%c0_12, %c0_13] : memref<8x128xf32, #tpu.memory_space<vmem>>, vector<8x128xf32>
    tpu.vector_store %arg6[%c0_12, %c0_13], %16 {strides = array<i32>} : memref<8x128xf32, #tpu.memory_space<vmem>>, vector<8x128xf32>,
    return
  }
  func.func @transform_0(%arg0: i32) -> (i32, i32) {
    %c0_i32 = arith.constant 0 : i32
    %c0_i32_0 = arith.constant 0 : i32
    return %arg0, %c0_i32 : i32, i32
  }
  func.func @transform_1(%arg0: i32) -> (i32, i32) {
    %c0_i32 = arith.constant 0 : i32
    %c0_i32_0 = arith.constant 0 : i32
    %c0_i32_1 = arith.constant 0 : i32
    return %c0_i32, %c0_i32_0 : i32, i32
  }
  func.func @transform_2(%arg0: i32) -> (i32, i32) {
    %c0_i32 = arith.constant 0 : i32
    %c0_i32_0 = arith.constant 0 : i32
    %c0_i32_1 = arith.constant 0 : i32
    return %c0_i32, %c0_i32_0 : i32, i32
  }
  func.func @transform_3(%arg0: i32) -> (i32, i32) {
    %c0_i32 = arith.constant 0 : i32
    %c0_i32_0 = arith.constant 0 : i32
    %c0_i32_1 = arith.constant 0 : i32
    return %c0_i32, %c0_i32_0 : i32, i32
  }
  func.func @transform_4(%arg0: i32) -> (i32, i32) {
    %c0_i32 = arith.constant 0 : i32
    %c0_i32_0 = arith.constant 0 : i32
    %c0_i32_1 = arith.constant 0 : i32
    return %c0_i32, %c0_i32_0 : i32, i32
  }
  func.func @transform_5(%arg0: i32) -> (i32, i32) {
    %c0_i32 = arith.constant 0 : i32
    %c0_i32_0 = arith.constant 0 : i32
    return %arg0, %c0_i32 : i32, i32
  }
}

</mosaic_0001>

<llo_original>
// kernel: _relu_block_forward.1
$region0: #{_relu_block_forward.1}
  #allocation0 [shape = 'u32[]', space=smem, size = 0x4, offset = 0x4, fixed_abs, tag = 'smem constant byte address 0x4 - core index']
  #allocation1 [shape = 'u32[144,128]{1,0:T(1,128)}', space=vmem, size = 0x12000, scoped, tag = 'internal scratch']
  %s0 = inlined_call_operand.vmem [shape: f32[8,128], index: 0, kind: input, shape index: {}]
  %s1 = inlined_call_operand.hbm [shape: bf16[128,128], index: 1, kind: input, shape index: {}]
  %s2 = inlined_call_operand.vmem [shape: f32[1,128], index: 2, kind: input, shape index: {}]
  %s3 = inlined_call_operand.hbm [shape: bf16[128,128], index: 3, kind: input, shape index: {}]
  %s4 = inlined_call_operand.vmem [shape: f32[1,128], index: 4, kind: input, shape index: {}]
  %s5 = inlined_call_operand.hbm [shape: f32[8,128], index: 5, kind: output, shape index: {}]
  %s6 = sld [smem:[#allocation0]]
  $region38: #{_relu_block_forward.1} parent=0
    _
  %s8 = ssub.s32 1, %s6
  %s9 = scalar_select 0, %s8, %s6
  $region1: #{_relu_block_forward.1} parent=0
    #allocation2 [shape = 'u8[32768]{0}', space=vmem, size = 0x8000, scoped, tag = 'input window, operand 1, single buffered']
    #allocation3 [shape = 's32[1]{0}', space=sflag, size = 0x4, scoped, tag = 'scoped memory for _relu_block_forward.1']
    #allocation4 [shape = 's32[1]{0}', space=sflag, size = 0x4, scoped, tag = 'scoped memory for _relu_block_forward.1']
    #allocation5 [shape = 'u8[32768]{0}', space=vmem, size = 0x8000, scoped, tag = 'input window, operand 3, single buffered']
    #allocation6 [shape = 's32[1]{0}', space=sflag, size = 0x4, scoped, tag = 'scoped memory for _relu_block_forward.1']
    #allocation7 [shape = 'u8[4096]{0}', space=vmem, size = 0x1000, scoped, tag = 'output window, operand 0, single buffered']
    %10 = vsyncpa [#allocation3], 0
    %11 = vsyncpa [#allocation6], 0
    %12 = vsyncpa [#allocation4], 0
    // Predicated region
    $region2: #{_relu_block_forward.1} parent=1 // pred_check
      _
    $region3: #{_relu_block_forward.1} parent=1 // pred_check_branch
      %14 = sbr.rel (0) target = $region5
    $region4: #{_relu_block_forward.1} parent=1 // pred_region
      _
    $region5: #{_relu_block_forward.1} parent=1 // pred_fallthru
      _
    // Predicated region
    $region6: #{_relu_block_forward.1} parent=1 // pred_check
      _
    $region7: #{_relu_block_forward.1} parent=1 // pred_check_branch
      %16 = sbr.rel (0) target = $region9
    $region8: #{_relu_block_forward.1} parent=1 // pred_region
      %s18 = ssub.s32 1024, 1024
      %19 = vsyncadd [#allocation3], %s18
      %s20 = sshll.u32 [#allocation2], 4
      %s21 = int_to_ptr.vmem [resolvable:$true] %s20
      %26 = dma.hbm_to_vmem [thread:$0]  %s1, 1024, %s21, [#allocation3], 64, 64, 4
    $region9: #{_relu_block_forward.1} parent=1 // pred_fallthru
      _
    // Predicated region
    $region10: #{_relu_block_forward.1} parent=1 // pred_check
      _
    $region11: #{_relu_block_forward.1} parent=1 // pred_check_branch
      %28 = sbr.rel (0) target = $region13
    $region12: #{_relu_block_forward.1} parent=1 // pred_region
      _
    $region13: #{_relu_block_forward.1} parent=1 // pred_fallthru
      _
    // Predicated region
    $region14: #{_relu_block_forward.1} parent=1 // pred_check
      _
    $region15: #{_relu_block_forward.1} parent=1 // pred_check_branch
      %30 = sbr.rel (0) target = $region17
    $region16: #{_relu_block_forward.1} parent=1 // pred_region
      %s32 = ssub.s32 1024, 1024
      %33 = vsyncadd [#allocation6], %s32
      %s34 = sshll.u32 [#allocation5], 4
      %s35 = int_to_ptr.vmem [resolvable:$true] %s34
      %40 = dma.hbm_to_vmem [thread:$0]  %s3, 1024, %s35, [#allocation6], 64, 64, 4
    $region17: #{_relu_block_forward.1} parent=1 // pred_fallthru
      _
    // Predicated region
    $region18: #{_relu_block_forward.1} parent=1 // pred_check
      _
    $region19: #{_relu_block_forward.1} parent=1 // pred_check_branch
      %42 = sbr.rel (0) target = $region21
    $region20: #{_relu_block_forward.1} parent=1 // pred_region
      _
    $region21: #{_relu_block_forward.1} parent=1 // pred_fallthru
      _
    // Predicated region
    $region22: #{_relu_block_forward.1} parent=1 // pred_check
      _
    $region23: #{_relu_block_forward.1} parent=1 // pred_check_branch
      %44 = sbr.rel (0) target = $region25
    $region24: #{_relu_block_forward.1} parent=1 // pred_region
      %45 = dma.done [#allocation3], 1024
    $region25: #{_relu_block_forward.1} parent=1 // pred_fallthru
      _
    // Predicated region
    $region26: #{_relu_block_forward.1} parent=1 // pred_check
      _
    $region27: #{_relu_block_forward.1} parent=1 // pred_check_branch
      %47 = sbr.rel (0) target = $region29
    $region28: #{_relu_block_forward.1} parent=1 // pred_region
      %48 = dma.done [#allocation6], 1024
    $region29: #{_relu_block_forward.1} parent=1 // pred_fallthru
      _
    %v50 = vld [vmem:[%s0] sm:$0xff]
    %v51 = vpack.c.bf16 %v50, %v50
    %v52 = vld [vmem:[#allocation2] sm:$0xf]
    %v53 = vld [vmem:[#allocation2 + $0x4] sm:$0xf]
    %v54 = vld [vmem:[#allocation2 + $0x8] sm:$0xf]
    %v55 = vld [vmem:[#allocation2 + $0xc] sm:$0xf]
    %v56 = vld [vmem:[#allocation2 + $0x10] sm:$0xf]
    %v57 = vld [vmem:[#allocation2 + $0x14] sm:$0xf]
    %v58 = vld [vmem:[#allocation2 + $0x18] sm:$0xf]
    %v59 = vld [vmem:[#allocation2 + $0x1c] sm:$0xf]
    %v60 = vld [vmem:[#allocation2 + $0x20] sm:$0xf]
    %v61 = vld [vmem:[#allocation2 + $0x24] sm:$0xf]
    %v62 = vld [vmem:[#allocation2 + $0x28] sm:$0xf]
    %v63 = vld [vmem:[#allocation2 + $0x2c] sm:$0xf]
    %v64 = vld [vmem:[#allocation2 + $0x30] sm:$0xf]
    %v65 = vld [vmem:[#allocation2 + $0x34] sm:$0xf]
    %v66 = vld [vmem:[#allocation2 + $0x38] sm:$0xf]
    %v67 = vld [vmem:[#allocation2 + $0x3c] sm:$0xf]
    %v68 = vld [vmem:[%s2] sm:$0x1]
    %v70 = vlaneseq
    %v71 = vshrl.u32 %v70, 7
    %v72 = vsub.s32 0, %v71
    %v73 = vrot.slane %v68, %v72
    %v91 = vunpack.c.l.b16 %v52
    %v92 = vunpack.c.l.b16 %v53
    %v93 = vunpack.c.l.b16 %v54
    %v94 = vunpack.c.l.b16 %v55
    %v95 = vunpack.c.l.b16 %v56
    %v96 = vunpack.c.l.b16 %v57
    %v97 = vunpack.c.l.b16 %v58
    %v98 = vunpack.c.l.b16 %v59
    %v99 = vunpack.c.l.b16 %v60
    %v100 = vunpack.c.l.b16 %v61
    %v101 = vunpack.c.l.b16 %v62
    %v102 = vunpack.c.l.b16 %v63
    %v103 = vunpack.c.l.b16 %v64
    %v104 = vunpack.c.l.b16 %v65
    %v105 = vunpack.c.l.b16 %v66
    %v106 = vunpack.c.l.b16 %v67
    %v107 = vpack.c.b16 %v92, %v91
    %v108 = vpack.c.b16 %v94, %v93
    %v109 = vpack.c.b16 %v96, %v95
    %v110 = vpack.c.b16 %v98, %v97
    %v111 = vpack.c.b16 %v100, %v99
    %v112 = vpack.c.b16 %v102, %v101
    %v113 = vpack.c.b16 %v104, %v103
    %v114 = vpack.c.b16 %v106, %v105
    %123 = vmatprep.subr.bf16.mxu0 0
    %124 = vmatpush1.bf16.msra.mxu0 %v114
    %125 = vmatprep.subr.bf16.mxu0 0
    %126 = vmatpush1.bf16.msra.mxu0 %v113
    %127 = vmatprep.subr.bf16.mxu0 0
    %128 = vmatpush1.bf16.msra.mxu0 %v112
    %129 = vmatprep.subr.bf16.mxu0 0
    %130 = vmatpush1.bf16.msra.mxu0 %v111
    %131 = vmatprep.subr.bf16.mxu0 0
    %132 = vmatpush1.bf16.msra.mxu0 %v110
    %133 = vmatprep.subr.bf16.mxu0 0
    %134 = vmatpush1.bf16.msra.mxu0 %v109
    %135 = vmatprep.subr.bf16.mxu0 0
    %136 = vmatpush1.bf16.msra.mxu0 %v108
    %137 = vmatprep.subr.bf16.mxu0 0
    %138 = vmatpush1.bf16.msra.mxu0 %v107
    %139 = vmatprep.subr.bf16.mxu0 0
    %140 = vmatpush2.bf16.msra.mxu0 0
    %141 = vmatprep.subr.bf16.mxu0 0
    %142 = vmatpush2.bf16.msra.mxu0 0
    %143 = vmatprep.subr.bf16.mxu0 0
    %144 = vmatpush2.bf16.msra.mxu0 0
    %145 = vmatprep.subr.bf16.mxu0 0
    %146 = vmatpush2.bf16.msra.mxu0 0
    %147 = vmatprep.subr.bf16.mxu0 0
    %148 = vmatpush2.bf16.msra.mxu0 0
    %149 = vmatprep.subr.bf16.mxu0 0
    %150 = vmatpush2.bf16.msra.mxu0 0
    %151 = vmatprep.subr.bf16.mxu0 0
    %152 = vmatpush2.bf16.msra.mxu0 0
    %153 = vmatprep.subr.bf16.mxu0 0
    %154 = vmatpush2.bf16.msra.mxu0 0
    %155 = vmatprep.mubr.bf16.mxu0 0
    %156 = vmatmul.mubr.bf16.gmra.mxu0 %v51
    %v157 = vpop.f32.mrf.mxu0
    %v158 = vadd.f32 %v73, %v157
    %v159 = vpop.f32.mrf.mxu0
    %v160 = vpop.f32.mrf.mxu0
    %v161 = vpop.f32.mrf.mxu0
    %162 = vdwg.mxu0
    %v163 = vmax.f32 %v158, 0.0
    %v164 = vpack.c.bf16 %v163, %v163
    %v165 = vld [vmem:[#allocation5] sm:$0xf]
    %v166 = vld [vmem:[#allocation5 + $0x4] sm:$0xf]
    %v167 = vld [vmem:[#allocation5 + $0x8] sm:$0xf]
    %v168 = vld [vmem:[#allocation5 + $0xc] sm:$0xf]
    %v169 = vld [vmem:[#allocation5 + $0x10] sm:$0xf]
    %v170 = vld [vmem:[#allocation5 + $0x14] sm:$0xf]
    %v171 = vld [vmem:[#allocation5 + $0x18] sm:$0xf]
    %v172 = vld [vmem:[#allocation5 + $0x1c] sm:$0xf]
    %v173 = vld [vmem:[#allocation5 + $0x20] sm:$0xf]
    %v174 = vld [vmem:[#allocation5 + $0x24] sm:$0xf]
    %v175 = vld [vmem:[#allocation5 + $0x28] sm:$0xf]
    %v176 = vld [vmem:[#allocation5 + $0x2c] sm:$0xf]
    %v177 = vld [vmem:[#allocation5 + $0x30] sm:$0xf]
    %v178 = vld [vmem:[#allocation5 + $0x34] sm:$0xf]
    %v179 = vld [vmem:[#allocation5 + $0x38] sm:$0xf]
    %v180 = vld [vmem:[#allocation5 + $0x3c] sm:$0xf]
    %v181 = vld [vmem:[%s4] sm:$0x1]
    %v183 = vlaneseq
    %v184 = vshrl.u32 %v183, 7
    %v185 = vsub.s32 0, %v184
    %v186 = vrot.slane %v181, %v185
    %v204 = vunpack.c.l.b16 %v165
    %v205 = vunpack.c.l.b16 %v166
    %v206 = vunpack.c.l.b16 %v167
    %v207 = vunpack.c.l.b16 %v168
    %v208 = vunpack.c.l.b16 %v169
    %v209 = vunpack.c.l.b16 %v170
    %v210 = vunpack.c.l.b16 %v171
    %v211 = vunpack.c.l.b16 %v172
    %v212 = vunpack.c.l.b16 %v173
    %v213 = vunpack.c.l.b16 %v174
    %v214 = vunpack.c.l.b16 %v175
    %v215 = vunpack.c.l.b16 %v176
    %v216 = vunpack.c.l.b16 %v177
    %v217 = vunpack.c.l.b16 %v178
    %v218 = vunpack.c.l.b16 %v179
    %v219 = vunpack.c.l.b16 %v180
    %v220 = vpack.c.b16 %v205, %v204
    %v221 = vpack.c.b16 %v207, %v206
    %v222 = vpack.c.b16 %v209, %v208
    %v223 = vpack.c.b16 %v211, %v210
    %v224 = vpack.c.b16 %v213, %v212
    %v225 = vpack.c.b16 %v215, %v214
    %v226 = vpack.c.b16 %v217, %v216
    %v227 = vpack.c.b16 %v219, %v218
    %236 = vmatprep.subr.bf16.mxu0 0
    %237 = vmatpush1.bf16.msra.mxu0 %v227
    %238 = vmatprep.subr.bf16.mxu0 0
    %239 = vmatpush1.bf16.msra.mxu0 %v226
    %240 = vmatprep.subr.bf16.mxu0 0
    %241 = vmatpush1.bf16.msra.mxu0 %v225
    %242 = vmatprep.subr.bf16.mxu0 0
    %243 = vmatpush1.bf16.msra.mxu0 %v224
    %244 = vmatprep.subr.bf16.mxu0 0
    %245 = vmatpush1.bf16.msra.mxu0 %v223
    %246 = vmatprep.subr.bf16.mxu0 0
    %247 = vmatpush1.bf16.msra.mxu0 %v222
    %248 = vmatprep.subr.bf16.mxu0 0
    %249 = vmatpush1.bf16.msra.mxu0 %v221
    %250 = vmatprep.subr.bf16.mxu0 0
    %251 = vmatpush1.bf16.msra.mxu0 %v220
    %252 = vmatprep.subr.bf16.mxu0 0
    %253 = vmatpush2.bf16.msra.mxu0 0
    %254 = vmatprep.subr.bf16.mxu0 0
    %255 = vmatpush2.bf16.msra.mxu0 0
    %256 = vmatprep.subr.bf16.mxu0 0
    %257 = vmatpush2.bf16.msra.mxu0 0
    %258 = vmatprep.subr.bf16.mxu0 0
    %259 = vmatpush2.bf16.msra.mxu0 0
    %260 = vmatprep.subr.bf16.mxu0 0
    %261 = vmatpush2.bf16.msra.mxu0 0
    %262 = vmatprep.subr.bf16.mxu0 0
    %263 = vmatpush2.bf16.msra.mxu0 0
    %264 = vmatprep.subr.bf16.mxu0 0
    %265 = vmatpush2.bf16.msra.mxu0 0
    %266 = vmatprep.subr.bf16.mxu0 0
    %267 = vmatpush2.bf16.msra.mxu0 0
    %268 = vmatprep.mubr.bf16.mxu0 0
    %269 = vmatmul.mubr.bf16.gmra.mxu0 %v164
    %v270 = vpop.f32.mrf.mxu0
    %v271 = vadd.f32 %v186, %v270
    %v272 = vpop.f32.mrf.mxu0
    %v273 = vpop.f32.mrf.mxu0
    %v274 = vpop.f32.mrf.mxu0
    %275 = vdwg.mxu0
    %v276 = vmax.f32 %v271, 0.0
    %277 = vst [vmem:[#allocation7] sm:$0xff] %v276
    // Predicated region
    $region30: #{_relu_block_forward.1} parent=1 // pred_check
      _
    $region31: #{_relu_block_forward.1} parent=1 // pred_check_branch
      %279 = sbr.rel (0) target = $region33
    $region32: #{_relu_block_forward.1} parent=1 // pred_region
      %s281 = ssub.s32 128, 128
      %282 = vsyncadd [#allocation4], %s281
      %s284 = sshll.u32 [#allocation7], 4
      %s285 = int_to_ptr.vmem [resolvable:$true] %s284
      %287 = dma.vmem_to_hbm [thread:$0]  %s285, 128, %s5, [#allocation4]
    $region33: #{_relu_block_forward.1} parent=1 // pred_fallthru
      _
    // Predicated region
    $region34: #{_relu_block_forward.1} parent=1 // pred_check
      _
    $region35: #{_relu_block_forward.1} parent=1 // pred_check_branch
      %289 = sbr.rel (0) target = $region37
    $region36: #{_relu_block_forward.1} parent=1 // pred_region
      %290 = dma.done [#allocation4], 128
    $region37: #{_relu_block_forward.1} parent=1 // pred_fallthru
      _
    %291 = vsyncpa [#allocation3], 1
    %292 = vsyncpa [#allocation6], 1
    %293 = vsyncpa [#allocation4], 1

</llo_original>
